<compile_context>
chip_gen: v7x
topology: tpu7x:2x2x1
jax: 0.10.0
libtpu: 0.0.40
codegen_flags: <defaults>
</compile_context>

<pallas_src>
from functools import partial

import jax
import jax.numpy as jnp
from jax.experimental import pallas as pl
from jax.experimental.pallas import tpu as pltpu


def _round_up(n: int, m: int) -> int:
    return ((n + m - 1) // m) * m


def _mlp_kernel(xT_ref, w1_ref, b1_ref, w2_ref, b2_ref, w3c_ref, b3_ref, o_ref):
    """Fused 3-layer MLP on one (10, TM) batch-in-lanes tile."""
    xT = xT_ref[...]                                                  # (10, TM)
    h1 = jnp.dot(w1_ref[...], xT, preferred_element_type=jnp.float32) + b1_ref[...]
    h1 = jnp.maximum(h1, 0.0)                                         # (50, TM)
    h2 = jnp.dot(w2_ref[...], h1, preferred_element_type=jnp.float32) + b2_ref[...]
    h2 = jnp.maximum(h2, 0.0)                                         # (10, TM)
    # fc3 (out=1, in=10): too small for the MXU -> VPU broadcast-mul + sublane
    # (XLU) reduction; result stays lane-dense.
    y = jnp.sum(h2 * w3c_ref[...], axis=0, keepdims=True) + b3_ref[...]  # (1, TM)
    o_ref[...] = y.astype(o_ref.dtype)


def prepare_params(params):
    """One-time prep outside the hot path.  PyTorch (out,in) weights are already the
    correct LHS layout for the batch-in-lanes formulation; biases become columns."""
    return {
        "w1":  jnp.asarray(params["fc1_w"]),             # (50, 10)
        "b1":  jnp.asarray(params["fc1_b"])[:, None],     # (50, 1)
        "w2":  jnp.asarray(params["fc2_w"]),             # (10, 50)
        "b2":  jnp.asarray(params["fc2_b"])[:, None],     # (10, 1)
        "w3c": jnp.asarray(params["fc3_w"]).T,            # (10, 1) fc3 row as a column
        "b3":  jnp.asarray(params["fc3_b"])[:, None],     # (1, 1)
    }


@partial(jax.jit, static_argnames=("tm",))
def simple_nn_forward(x, prep, *, tm=32768):
    """x: (B, 10) float32; prep: output of prepare_params.  Returns (B, 1)."""
    B, F = x.shape
    # One relayout: batch onto the lane axis.  (Output transpose at the end is on a
    # (1, B) array -> negligible.)
    xT = x.T                                              # (10, B)

    # Lane-axis tile: multiple of 128; cap so footprint stays tiny everywhere
    # (incl. 64 MiB v7x VMEM) and clamp to ~B/2 so mid-size batches still yield
    # >= 2 grid steps for the v7x megacore.  No padding of x: the ragged last
    # block is masked by Pallas.
    TM = min(tm, _round_up(max(-(-B // 2), 1), 128))
    num_tiles = pl.cdiv(B, TM)

    def full(a):  # grid-invariant, VMEM-resident block
        return pl.BlockSpec(a.shape, lambda i: (0, 0))

    out = pl.pallas_call(
        _mlp_kernel,
        out_shape=jax.ShapeDtypeStruct((1, B), jnp.float32),
        grid=(num_tiles,),
        in_specs=[
            pl.BlockSpec((F, TM), lambda i: (0, i)),      # streamed x^T tile
            full(prep["w1"]), full(prep["b1"]),
            full(prep["w2"]), full(prep["b2"]),
            full(prep["w3c"]), full(prep["b3"]),
        ],
        out_specs=pl.BlockSpec((1, TM), lambda i: (0, i)),  # lane-dense output slab
        compiler_params=pltpu.CompilerParams(
            dimension_semantics=("parallel",),            # shard batch tiles across TCs
            vmem_limit_bytes=48 * 1024 * 1024,            # ample; < v7x 64 MiB physical
        ),
    )(xT, prep["w1"], prep["b1"], prep["w2"], prep["b2"],
      prep["w3c"], prep["b3"])
    return out.T                                          # (B, 1)


def init_params(key):
    """Deterministic init mimicking nn.Linear default (uniform +/- 1/sqrt(fan_in))."""
    def linear_init(k, fan_in, fan_out):
        kw, kb = jax.random.split(k)
        bound = 1.0 / jnp.sqrt(fan_in)
        w = jax.random.uniform(kw, (fan_out, fan_in), jnp.float32, -bound, bound)
        b = jax.random.uniform(kb, (fan_out,), jnp.float32, -bound, bound)
        return w, b

    k1, k2, k3 = jax.random.split(key, 3)
    fc1_w, fc1_b = linear_init(k1, 10, 50)
    fc2_w, fc2_b = linear_init(k2, 50, 10)
    fc3_w, fc3_b = linear_init(k3, 10, 1)
    return {
        "fc1_w": fc1_w, "fc1_b": fc1_b,
        "fc2_w": fc2_w, "fc2_b": fc2_b,
        "fc3_w": fc3_w, "fc3_b": fc3_b,
    }


def _reference(x, p):
    h1 = jnp.maximum(x @ p["fc1_w"].T + p["fc1_b"], 0.0)
    h2 = jnp.maximum(h1 @ p["fc2_w"].T + p["fc2_b"], 0.0)
    return h2 @ p["fc3_w"].T + p["fc3_b"]


if __name__ == "__main__":
    key = jax.random.PRNGKey(0)
    kx, kp = jax.random.split(key)
    params = init_params(kp)
    prep = prepare_params(params)

    # Main check (B=8, matches original module usage scale).
    x = jax.random.normal(kx, (8, 10), jnp.float32)
    out = jax.block_until_ready(simple_nn_forward(x, prep))
    ref = _reference(x, params)
    assert out.shape == (8, 1), out.shape
    assert jnp.allclose(out, ref, atol=1e-5, rtol=1e-5), "mismatch vs reference (B=8)"

    # Ragged batch: exercises the masked partial last block (no jnp.pad copy).
    x2 = jax.random.normal(jax.random.PRNGKey(1), (13, 10), jnp.float32)
    out2 = jax.block_until_ready(simple_nn_forward(x2, prep))
    ref2 = _reference(x2, params)
    assert out2.shape == (13, 1), out2.shape
    assert jnp.allclose(out2, ref2, atol=1e-5, rtol=1e-5), "mismatch vs reference (B=13)"

    # Multi-tile batch: exercises >=2 grid steps (megacore path) + ragged last tile.
    x3 = jax.random.normal(jax.random.PRNGKey(2), (300, 10), jnp.float32)
    out3 = jax.block_until_ready(simple_nn_forward(x3, prep))
    ref3 = _reference(x3, params)
    assert out3.shape == (300, 1), out3.shape
    assert jnp.allclose(out3, ref3, atol=1e-5, rtol=1e-5), "mismatch vs reference (B=300)"

    print("KERNEL_OK")
</pallas_src>

<mosaic_0001>
module attributes {stable_mosaic.version = 11 : i64} {
  func.func @_mlp_kernel(%arg0: i32, %arg1: memref<10x128xf32, #tpu.memory_space<vmem>>, %arg2: memref<50x10xf32, #tpu.memory_space<vmem>>, %arg3: memref<50x1xf32, #tpu.memory_space<vmem>>, %arg4: memref<10x50xf32, #tpu.memory_space<vmem>>, %arg5: memref<10x1xf32, #tpu.memory_space<vmem>>, %arg6: memref<10x1xf32, #tpu.memory_space<vmem>>, %arg7: memref<1x1xf32, #tpu.memory_space<vmem>>, %arg8: memref<1x128xf32, #tpu.memory_space<vmem>>) attributes {dimension_semantics = [#tpu.dimension_semantics<parallel>], iteration_bounds = array<i64: 1>, scalar_prefetch = 0 : i64, scratch_operands = 0 : i64, tpu.core_type = #tpu.core_type<tc>, window_params = [{transform_indices = @transform_0, window_bounds = array<i64: 10, 128>}, {pipeline_mode = #tpu.pipeline_mode<synchronous>, transform_indices = @transform_1, window_bounds = array<i64: 50, 10>}, {pipeline_mode = #tpu.pipeline_mode<synchronous>, transform_indices = @transform_2, window_bounds = array<i64: 50, 1>}, {pipeline_mode = #tpu.pipeline_mode<synchronous>, transform_indices = @transform_3, window_bounds = array<i64: 10, 50>}, {pipeline_mode = #tpu.pipeline_mode<synchronous>, transform_indices = @transform_4, window_bounds = array<i64: 10, 1>}, {pipeline_mode = #tpu.pipeline_mode<synchronous>, transform_indices = @transform_5, window_bounds = array<i64: 10, 1>}, {pipeline_mode = #tpu.pipeline_mode<synchronous>, transform_indices = @transform_6, window_bounds = array<i64: 1, 1>}, {transform_indices = @transform_7, window_bounds = array<i64: 1, 128>}]} {
    %c0 = arith.constant 0 : index
    %c0_0 = arith.constant 0 : index
    %0 = vector.load %arg1[%c0, %c0_0] : memref<10x128xf32, #tpu.memory_space<vmem>>, vector<10x128xf32>
    %c0_1 = arith.constant 0 : index
    %c0_2 = arith.constant 0 : index
    %1 = vector.load %arg2[%c0_1, %c0_2] : memref<50x10xf32, #tpu.memory_space<vmem>>, vector<50x10xf32>
    %cst = arith.constant dense<0.000000e+00> : vector<50x128xf32>
    %2 = tpu.matmul %1, %0, %cst {dimension_numbers = #tpu.dot_dimension_numbers<[1], [0], [0], [1], [0, 0, 1, 1], [], []>} : vector<50x10xf32>, vector<10x128xf32>, vector<50x128xf32> -> vector<50x128xf32>
    %c0_3 = arith.constant 0 : index
    %c0_4 = arith.constant 0 : index
    %3 = vector.load %arg3[%c0_3, %c0_4] : memref<50x1xf32, #tpu.memory_space<vmem>>, vector<50x1xf32>
    %4 = vector.broadcast %3 : vector<50x1xf32> to vector<50x128xf32>
    %5 = arith.addf %2, %4 : vector<50x128xf32>
    %cst_5 = arith.constant 0.000000e+00 : f32
    %6 = vector.broadcast %cst_5 : f32 to vector<50x128xf32>
    %7 = arith.maximumf %5, %6 : vector<50x128xf32>
    %c0_6 = arith.constant 0 : index
    %c0_7 = arith.constant 0 : index
    %8 = vector.load %arg4[%c0_6, %c0_7] : memref<10x50xf32, #tpu.memory_space<vmem>>, vector<10x50xf32>
    %cst_8 = arith.constant dense<0.000000e+00> : vector<10x128xf32>
    %9 = tpu.matmul %8, %7, %cst_8 {dimension_numbers = #tpu.dot_dimension_numbers<[1], [0], [0], [1], [0, 0, 1, 1], [], []>} : vector<10x50xf32>, vector<50x128xf32>, vector<10x128xf32> -> vector<10x128xf32>
    %c0_9 = arith.constant 0 : index
    %c0_10 = arith.constant 0 : index
    %10 = vector.load %arg5[%c0_9, %c0_10] : memref<10x1xf32, #tpu.memory_space<vmem>>, vector<10x1xf32>
    %11 = vector.broadcast %10 : vector<10x1xf32> to vector<10x128xf32>
    %12 = arith.addf %9, %11 : vector<10x128xf32>
    %cst_11 = arith.constant 0.000000e+00 : f32
    %13 = vector.broadcast %cst_11 : f32 to vector<10x128xf32>
    %14 = arith.maximumf %12, %13 : vector<10x128xf32>
    %c0_12 = arith.constant 0 : index
    %c0_13 = arith.constant 0 : index
    %15 = vector.load %arg6[%c0_12, %c0_13] : memref<10x1xf32, #tpu.memory_space<vmem>>, vector<10x1xf32>
    %16 = vector.broadcast %15 : vector<10x1xf32> to vector<10x128xf32>
    %17 = arith.mulf %14, %16 : vector<10x128xf32>
    %cst_14 = arith.constant dense<0.000000e+00> : vector<128xf32>
    %18 = vector.multi_reduction <add>, %17, %cst_14 [0] : vector<10x128xf32> to vector<128xf32>
    %19 = vector.shape_cast %18 : vector<128xf32> to vector<1x128xf32>
    %c0_15 = arith.constant 0 : index
    %c0_16 = arith.constant 0 : index
    %20 = vector.load %arg7[%c0_15, %c0_16] : memref<1x1xf32, #tpu.memory_space<vmem>>, vector<1x1xf32>
    %21 = vector.broadcast %20 : vector<1x1xf32> to vector<1x128xf32>
    %22 = arith.addf %19, %21 : vector<1x128xf32>
    %c0_17 = arith.constant 0 : index
    %c0_18 = arith.constant 0 : index
    %23 = vector.load %arg8[%c0_17, %c0_18] : memref<1x128xf32, #tpu.memory_space<vmem>>, vector<1x128xf32>
    tpu.vector_store %arg8[%c0_17, %c0_18], %22 {strides = array<i32>} : memref<1x128xf32, #tpu.memory_space<vmem>>, vector<1x128xf32>,
    return
  }
  func.func @transform_0(%arg0: i32) -> (i32, i32) {
    %c0_i32 = arith.constant 0 : i32
    %c0_i32_0 = arith.constant 0 : i32
    return %c0_i32, %arg0 : i32, i32
  }
  func.func @transform_1(%arg0: i32) -> (i32, i32) {
    %c0_i32 = arith.constant 0 : i32
    %c0_i32_0 = arith.constant 0 : i32
    %c0_i32_1 = arith.constant 0 : i32
    return %c0_i32, %c0_i32_0 : i32, i32
  }
  func.func @transform_2(%arg0: i32) -> (i32, i32) {
    %c0_i32 = arith.constant 0 : i32
    %c0_i32_0 = arith.constant 0 : i32
    %c0_i32_1 = arith.constant 0 : i32
    return %c0_i32, %c0_i32_0 : i32, i32
  }
  func.func @transform_3(%arg0: i32) -> (i32, i32) {
    %c0_i32 = arith.constant 0 : i32
    %c0_i32_0 = arith.constant 0 : i32
    %c0_i32_1 = arith.constant 0 : i32
    return %c0_i32, %c0_i32_0 : i32, i32
  }
  func.func @transform_4(%arg0: i32) -> (i32, i32) {
    %c0_i32 = arith.constant 0 : i32
    %c0_i32_0 = arith.constant 0 : i32
    %c0_i32_1 = arith.constant 0 : i32
    return %c0_i32, %c0_i32_0 : i32, i32
  }
  func.func @transform_5(%arg0: i32) -> (i32, i32) {
    %c0_i32 = arith.constant 0 : i32
    %c0_i32_0 = arith.constant 0 : i32
    %c0_i32_1 = arith.constant 0 : i32
    return %c0_i32, %c0_i32_0 : i32, i32
  }
  func.func @transform_6(%arg0: i32) -> (i32, i32) {
    %c0_i32 = arith.constant 0 : i32
    %c0_i32_0 = arith.constant 0 : i32
    %c0_i32_1 = arith.constant 0 : i32
    return %c0_i32, %c0_i32_0 : i32, i32
  }
  func.func @transform_7(%arg0: i32) -> (i32, i32) {
    %c0_i32 = arith.constant 0 : i32
    %c0_i32_0 = arith.constant 0 : i32
    return %c0_i32, %arg0 : i32, i32
  }
}

</mosaic_0001>

<llo_original>
// kernel: simple_nn_forward.1
$region0: #{simple_nn_forward.1}
  #allocation0 [shape = 'u32[]', space=smem, size = 0x4, offset = 0x4, fixed_abs, tag = 'smem constant byte address 0x4 - core index']
  #allocation1 [shape = 'u32[144,128]{1,0:T(1,128)}', space=vmem, size = 0x12000, scoped, tag = 'internal scratch']
  #allocation2 [shape = 'f32[1,1]{1,0:T(1,128)S(1)}', space=vmem, size = 0x200, scoped, tag = 'scoped memory for simple_nn_forward.1']
  %s0 = inlined_call_operand.vmem [shape: f32[10,8], index: 0, kind: input, shape index: {}]
  %s1 = inlined_call_operand.vmem [shape: f32[50,10], index: 1, kind: input, shape index: {}]
  %s2 = inlined_call_operand.vmem [shape: f32[50,1], index: 2, kind: input, shape index: {}]
  %s3 = inlined_call_operand.vmem [shape: f32[10,50], index: 3, kind: input, shape index: {}]
  %s4 = inlined_call_operand.vmem [shape: f32[10,1], index: 4, kind: input, shape index: {}]
  %s5 = inlined_call_operand.vmem [shape: f32[10,1], index: 5, kind: input, shape index: {}]
  %s6 = inlined_call_operand.<no memory space> [shape: f32[1,1], index: 6, kind: input, shape index: {}]
  %s7 = inlined_call_operand.hbm [shape: f32[1,8], index: 7, kind: output, shape index: {}]
  %s8 = sld [smem:[#allocation0]]
  $region38: #{simple_nn_forward.1} parent=0
    _
  %s10 = ssub.s32 1, %s8
  %s11 = scalar_select 0, %s10, %s8
  %v12 = vstv %s6
  %13 = vst [vmem:[#allocation2] sm:$0x1] %v12
  $region1: #{simple_nn_forward.1} parent=0
    #allocation3 [shape = 'u8[512]{0}', space=vmem, size = 0x400, scoped, tag = 'output window, operand 0, single buffered']
    #allocation4 [shape = 's32[1]{0}', space=sflag, size = 0x4, scoped, tag = 'scoped memory for simple_nn_forward.1']
    %14 = vsyncpa [#allocation4], 0
    // Predicated region
    $region2: #{simple_nn_forward.1} parent=1 // pred_check
      _
    $region3: #{simple_nn_forward.1} parent=1 // pred_check_branch
      %16 = sbr.rel (0) target = $region5
    $region4: #{simple_nn_forward.1} parent=1 // pred_region
      _
    $region5: #{simple_nn_forward.1} parent=1 // pred_fallthru
      _
    // Predicated region
    $region6: #{simple_nn_forward.1} parent=1 // pred_check
      _
    $region7: #{simple_nn_forward.1} parent=1 // pred_check_branch
      %18 = sbr.rel (0) target = $region9
    $region8: #{simple_nn_forward.1} parent=1 // pred_region
      _
    $region9: #{simple_nn_forward.1} parent=1 // pred_fallthru
      _
    // Predicated region
    $region10: #{simple_nn_forward.1} parent=1 // pred_check
      _
    $region11: #{simple_nn_forward.1} parent=1 // pred_check_branch
      %20 = sbr.rel (0) target = $region13
    $region12: #{simple_nn_forward.1} parent=1 // pred_region
      _
    $region13: #{simple_nn_forward.1} parent=1 // pred_fallthru
      _
    // Predicated region
    $region14: #{simple_nn_forward.1} parent=1 // pred_check
      _
    $region15: #{simple_nn_forward.1} parent=1 // pred_check_branch
      %22 = sbr.rel (0) target = $region17
    $region16: #{simple_nn_forward.1} parent=1 // pred_region
      _
    $region17: #{simple_nn_forward.1} parent=1 // pred_fallthru
      _
    // Predicated region
    $region18: #{simple_nn_forward.1} parent=1 // pred_check
      _
    $region19: #{simple_nn_forward.1} parent=1 // pred_check_branch
      %24 = sbr.rel (0) target = $region21
    $region20: #{simple_nn_forward.1} parent=1 // pred_region
      _
    $region21: #{simple_nn_forward.1} parent=1 // pred_fallthru
      _
    // Predicated region
    $region22: #{simple_nn_forward.1} parent=1 // pred_check
      _
    $region23: #{simple_nn_forward.1} parent=1 // pred_check_branch
      %26 = sbr.rel (0) target = $region25
    $region24: #{simple_nn_forward.1} parent=1 // pred_region
      _
    $region25: #{simple_nn_forward.1} parent=1 // pred_fallthru
      _
    // Predicated region
    $region26: #{simple_nn_forward.1} parent=1 // pred_check
      _
    $region27: #{simple_nn_forward.1} parent=1 // pred_check_branch
      %28 = sbr.rel (0) target = $region29
    $region28: #{simple_nn_forward.1} parent=1 // pred_region
      _
    $region29: #{simple_nn_forward.1} parent=1 // pred_fallthru
      _
    %v29 = vld [vmem:[%s0] sm:$0xff]
    %v30 = vld [vmem:[%s0 + $0x8] sm:$0x3]
    %v31 = vld [vmem:[%s1] sm:$0xff]
    %v32 = vld [vmem:[%s1 + $0x8] sm:$0xff]
    %v33 = vld [vmem:[%s1 + $0x10] sm:$0xff]
    %v34 = vld [vmem:[%s1 + $0x18] sm:$0xff]
    %v35 = vld [vmem:[%s1 + $0x20] sm:$0xff]
    %v36 = vld [vmem:[%s1 + $0x28] sm:$0xff]
    %v37 = vld [vmem:[%s1 + $0x30] sm:$0x3]
    %v38 = vld [vmem:[%s2] sm:$0xff]
    %v39 = vld [vmem:[%s2 + $0x8] sm:$0xff]
    %v40 = vld [vmem:[%s2 + $0x10] sm:$0xff]
    %v41 = vld [vmem:[%s2 + $0x18] sm:$0xff]
    %v42 = vld [vmem:[%s2 + $0x20] sm:$0xff]
    %v43 = vld [vmem:[%s2 + $0x28] sm:$0xff]
    %v44 = vld [vmem:[%s2 + $0x30] sm:$0x3]
    %46 = vset.pattern.permute.xlu0 0
    %47 = vperm.xlu0 %46, %v38
    %v48 = vpop.permute.xlu0 %47
    %51 = vset.pattern.permute.xlu0 0
    %52 = vperm.xlu0 %51, %v39
    %v53 = vpop.permute.xlu0 %52
    %56 = vset.pattern.permute.xlu0 0
    %57 = vperm.xlu0 %56, %v40
    %v58 = vpop.permute.xlu0 %57
    %61 = vset.pattern.permute.xlu0 0
    %62 = vperm.xlu0 %61, %v41
    %v63 = vpop.permute.xlu0 %62
    %66 = vset.pattern.permute.xlu0 0
    %67 = vperm.xlu0 %66, %v42
    %v68 = vpop.permute.xlu0 %67
    %71 = vset.pattern.permute.xlu0 0
    %72 = vperm.xlu0 %71, %v43
    %v73 = vpop.permute.xlu0 %72
    %76 = vset.pattern.permute.xlu0 0
    %77 = vperm.xlu0 %76, %v44
    %v78 = vpop.permute.xlu0 %77
    %vm80 = vcmask 80896
    %v82 = vsel %vm80, %v31, 0
    %v85 = vsel %vm80, %v32, 0
    %v88 = vsel %vm80, %v33, 0
    %v91 = vsel %vm80, %v34, 0
    %v94 = vsel %vm80, %v35, 0
    %v97 = vsel %vm80, %v36, 0
    %v100 = vsel %vm80, %v37, 0
    %vm102 = vcmask 1041408
    %v104 = vsel %vm102, %v30, 0
    %106 = vmatprep.subr.mxu0 0.0
    %107 = vmatpush1.msra.mxu0 %v29
    %108 = vmatprep.subr.mxu0 0.0
    %109 = vmatpush1.msra.mxu0 %v104
    %110 = vmatprep.subr.mxu0 0.0
    %111 = vmatpush1.msra.mxu0 0.0
    %112 = vmatprep.subr.mxu0 0.0
    %113 = vmatpush1.msra.mxu0 0.0
    %114 = vmatprep.subr.mxu0 0.0
    %115 = vmatpush1.msra.mxu0 0.0
    %116 = vmatprep.subr.mxu0 0.0
    %117 = vmatpush1.msra.mxu0 0.0
    %118 = vmatprep.subr.mxu0 0.0
    %119 = vmatpush1.msra.mxu0 0.0
    %120 = vmatprep.subr.mxu0 0.0
    %121 = vmatpush1.msra.mxu0 0.0
    %122 = vmatprep.subr.mxu0 0.0
    %123 = vmatpush1.msra.mxu0 0.0
    %124 = vmatprep.subr.mxu0 0.0
    %125 = vmatpush1.msra.mxu0 0.0
    %126 = vmatprep.subr.mxu0 0.0
    %127 = vmatpush1.msra.mxu0 0.0
    %128 = vmatprep.subr.mxu0 0.0
    %129 = vmatpush1.msra.mxu0 0.0
    %130 = vmatprep.subr.mxu0 0.0
    %131 = vmatpush1.msra.mxu0 0.0
    %132 = vmatprep.subr.mxu0 0.0
    %133 = vmatpush1.msra.mxu0 0.0
    %134 = vmatprep.subr.mxu0 0.0
    %135 = vmatpush1.msra.mxu0 0.0
    %136 = vmatprep.subr.mxu0 0.0
    %137 = vmatpush1.msra.mxu0 0.0
    %138 = vmatprep.subr.mxu0 0.0
    %139 = vmatpush1.msra.mxu0 0.0
    %140 = vmatprep.subr.mxu0 0.0
    %141 = vmatpush1.msra.mxu0 0.0
    %142 = vmatprep.subr.mxu0 0.0
    %143 = vmatpush1.msra.mxu0 0.0
    %144 = vmatprep.subr.mxu0 0.0
    %145 = vmatpush1.msra.mxu0 0.0
    %146 = vmatprep.subr.mxu0 0.0
    %147 = vmatpush1.msra.mxu0 0.0
    %148 = vmatprep.subr.mxu0 0.0
    %149 = vmatpush1.msra.mxu0 0.0
    %150 = vmatprep.subr.mxu0 0.0
    %151 = vmatpush1.msra.mxu0 0.0
    %152 = vmatprep.subr.mxu0 0.0
    %153 = vmatpush1.msra.mxu0 0.0
    %154 = vmatprep.subr.mxu0 0.0
    %155 = vmatpush1.msra.mxu0 0.0
    %156 = vmatprep.subr.mxu0 0.0
    %157 = vmatpush1.msra.mxu0 0.0
    %158 = vmatprep.subr.mxu0 0.0
    %159 = vmatpush1.msra.mxu0 0.0
    %160 = vmatprep.subr.mxu0 0.0
    %161 = vmatpush1.msra.mxu0 0.0
    %162 = vmatprep.subr.mxu0 0.0
    %163 = vmatpush1.msra.mxu0 0.0
    %164 = vmatprep.subr.mxu0 0.0
    %165 = vmatpush1.msra.mxu0 0.0
    %166 = vmatprep.subr.mxu0 0.0
    %167 = vmatpush1.msra.mxu0 0.0
    %168 = vmatprep.subr.mxu0 0.0
    %169 = vmatpush1.msra.mxu0 0.0
    %170 = vmatprep.mubr.f32.mxu0 0.0
    %171 = vmatmul.mubr.f32.gmra.mrb[0].mxu0 %v82
    %v172 = vpop.f32.mrb[0].mxu0
    %v173 = vadd.f32 %v48, %v172
    %v174 = vpop.f32.mrb[0].mxu0
    %175 = vmatprep.mubr.f32.mxu0 0.0
    %176 = vmatmul.mubr.f32.gmra.mrb[0].mxu0 %v85
    %v177 = vpop.f32.mrb[0].mxu0
    %v178 = vadd.f32 %v53, %v177
    %v179 = vpop.f32.mrb[0].mxu0
    %180 = vmatprep.mubr.f32.mxu0 0.0
    %181 = vmatmul.mubr.f32.gmra.mrb[0].mxu0 %v88
    %v182 = vpop.f32.mrb[0].mxu0
    %v183 = vadd.f32 %v58, %v182
    %v184 = vpop.f32.mrb[0].mxu0
    %185 = vmatprep.mubr.f32.mxu0 0.0
    %186 = vmatmul.mubr.f32.gmra.mrb[0].mxu0 %v91
    %v187 = vpop.f32.mrb[0].mxu0
    %v188 = vadd.f32 %v63, %v187
    %v189 = vpop.f32.mrb[0].mxu0
    %190 = vmatprep.mubr.f32.mxu0 0.0
    %191 = vmatmul.mubr.f32.gmra.mrb[0].mxu0 %v94
    %v192 = vpop.f32.mrb[0].mxu0
    %v193 = vadd.f32 %v68, %v192
    %v194 = vpop.f32.mrb[0].mxu0
    %195 = vmatprep.mubr.f32.mxu0 0.0
    %196 = vmatmul.mubr.f32.gmra.mrb[0].mxu0 %v97
    %v197 = vpop.f32.mrb[0].mxu0
    %v198 = vadd.f32 %v73, %v197
    %v199 = vpop.f32.mrb[0].mxu0
    %200 = vmatprep.mubr.f32.mxu0 0.0
    %201 = vmatmul.mubr.f32.gmra.mrb[0].mxu0 %v100
    %v202 = vpop.f32.mrb[0].mxu0
    %v203 = vadd.f32 %v78, %v202
    %v204 = vpop.f32.mrb[0].mxu0
    %205 = vdwg.mxu0
    %v206 = vmax.f32 %v173, 0.0
    %v207 = vmax.f32 %v178, 0.0
    %v208 = vmax.f32 %v183, 0.0
    %v209 = vmax.f32 %v188, 0.0
    %v210 = vmax.f32 %v193, 0.0
    %v211 = vmax.f32 %v198, 0.0
    %v212 = vmax.f32 %v203, 0.0
    %v213 = vld [vmem:[%s3] sm:$0xff]
    %v214 = vld [vmem:[%s3 + $0x8] sm:$0x3]
    %v215 = vld [vmem:[%s4] sm:$0xff]
    %v216 = vld [vmem:[%s4 + $0x8] sm:$0x3]
    %218 = vset.pattern.permute.xlu0 0
    %219 = vperm.xlu0 %218, %v215
    %v220 = vpop.permute.xlu0 %219
    %223 = vset.pattern.permute.xlu0 0
    %224 = vperm.xlu0 %223, %v216
    %v225 = vpop.permute.xlu0 %224
    %vm227 = vcmask 408576
    %v229 = vsel %vm227, %v213, 0
    %v232 = vsel %vm227, %v214, 0
    %v235 = vsel %vm102, %v212, 0
    %237 = vmatprep.subr.mxu0 0.0
    %238 = vmatpush1.msra.mxu0 %v206
    %239 = vmatprep.subr.mxu0 0.0
    %240 = vmatpush1.msra.mxu0 %v207
    %241 = vmatprep.subr.mxu0 0.0
    %242 = vmatpush1.msra.mxu0 %v208
    %243 = vmatprep.subr.mxu0 0.0
    %244 = vmatpush1.msra.mxu0 %v209
    %245 = vmatprep.subr.mxu0 0.0
    %246 = vmatpush1.msra.mxu0 %v210
    %247 = vmatprep.subr.mxu0 0.0
    %248 = vmatpush1.msra.mxu0 %v211
    %249 = vmatprep.subr.mxu0 0.0
    %250 = vmatpush1.msra.mxu0 %v235
    %251 = vmatprep.subr.mxu0 0.0
    %252 = vmatpush1.msra.mxu0 0.0
    %253 = vmatprep.subr.mxu0 0.0
    %254 = vmatpush1.msra.mxu0 0.0
    %255 = vmatprep.subr.mxu0 0.0
    %256 = vmatpush1.msra.mxu0 0.0
    %257 = vmatprep.subr.mxu0 0.0
    %258 = vmatpush1.msra.mxu0 0.0
    %259 = vmatprep.subr.mxu0 0.0
    %260 = vmatpush1.msra.mxu0 0.0
    %261 = vmatprep.subr.mxu0 0.0
    %262 = vmatpush1.msra.mxu0 0.0
    %263 = vmatprep.subr.mxu0 0.0
    %264 = vmatpush1.msra.mxu0 0.0
    %265 = vmatprep.subr.mxu0 0.0
    %266 = vmatpush1.msra.mxu0 0.0
    %267 = vmatprep.subr.mxu0 0.0
    %268 = vmatpush1.msra.mxu0 0.0
    %269 = vmatprep.subr.mxu0 0.0
    %270 = vmatpush1.msra.mxu0 0.0
    %271 = vmatprep.subr.mxu0 0.0
    %272 = vmatpush1.msra.mxu0 0.0
    %273 = vmatprep.subr.mxu0 0.0
    %274 = vmatpush1.msra.mxu0 0.0
    %275 = vmatprep.subr.mxu0 0.0
    %276 = vmatpush1.msra.mxu0 0.0
    %277 = vmatprep.subr.mxu0 0.0
    %278 = vmatpush1.msra.mxu0 0.0
    %279 = vmatprep.subr.mxu0 0.0
    %280 = vmatpush1.msra.mxu0 0.0
    %281 = vmatprep.subr.mxu0 0.0
    %282 = vmatpush1.msra.mxu0 0.0
    %283 = vmatprep.subr.mxu0 0.0
    %284 = vmatpush1.msra.mxu0 0.0
    %285 = vmatprep.subr.mxu0 0.0
    %286 = vmatpush1.msra.mxu0 0.0
    %287 = vmatprep.subr.mxu0 0.0
    %288 = vmatpush1.msra.mxu0 0.0
    %289 = vmatprep.subr.mxu0 0.0
    %290 = vmatpush1.msra.mxu0 0.0
    %291 = vmatprep.subr.mxu0 0.0
    %292 = vmatpush1.msra.mxu0 0.0
    %293 = vmatprep.subr.mxu0 0.0
    %294 = vmatpush1.msra.mxu0 0.0
    %295 = vmatprep.subr.mxu0 0.0
    %296 = vmatpush1.msra.mxu0 0.0
    %297 = vmatprep.subr.mxu0 0.0
    %298 = vmatpush1.msra.mxu0 0.0
    %299 = vmatprep.subr.mxu0 0.0
    %300 = vmatpush1.msra.mxu0 0.0
    %301 = vmatprep.mubr.f32.mxu0 0.0
    %302 = vmatmul.mubr.f32.gmra.mrb[0].mxu0 %v229
    %v303 = vpop.f32.mrb[0].mxu0
    %v304 = vadd.f32 %v220, %v303
    %v305 = vpop.f32.mrb[0].mxu0
    %306 = vmatprep.mubr.f32.mxu0 0.0
    %307 = vmatmul.mubr.f32.gmra.mrb[0].mxu0 %v232
    %v308 = vpop.f32.mrb[0].mxu0
    %v309 = vadd.f32 %v225, %v308
    %v310 = vpop.f32.mrb[0].mxu0
    %311 = vdwg.mxu0
    %v312 = vmax.f32 %v304, 0.0
    %v313 = vmax.f32 %v309, 0.0
    %v314 = vld [vmem:[%s5] sm:$0xff]
    %v315 = vld [vmem:[%s5 + $0x8] sm:$0x3]
    %317 = vset.pattern.permute.xlu0 0
    %318 = vperm.xlu0 %317, %v314
    %v319 = vpop.permute.xlu0 %318
    %322 = vset.pattern.permute.xlu0 0
    %323 = vperm.xlu0 %322, %v315
    %v324 = vpop.permute.xlu0 %323
    %v326 = vmul.f32 %v312, %v319
    %v327 = vmul.f32 %v313, %v324
    %v328 = vsel %vm102, %v327, 0.0
    %v329 = vadd.f32 %v326, %v328
    %v330 = vrot.slane %v329, 4
    %v331 = vadd.f32 %v329, %v330
    %v332 = vrot.slane %v331, 2
    %v333 = vadd.f32 %v331, %v332
    %v334 = vrot.slane %v333, 1
    %v335 = vadd.f32 %v333, %v334
    %v336 = vld [vmem:[#allocation2] sm:$0x1]
    %338 = vset.pattern.permute.xlu0 0
    %339 = vperm.xlu0 %338, %v336
    %v340 = vpop.permute.xlu0 %339
    %v342 = vlaneseq
    %v343 = vshrl.u32 %v342, 7
    %v344 = vsub.s32 0, %v343
    %v345 = vrot.slane %v340, %v344
    %v346 = vadd.f32 %v335, %v345
    %347 = vst [vmem:[#allocation3] sm:$0x1] %v346
    // Predicated region
    $region30: #{simple_nn_forward.1} parent=1 // pred_check
      _
    $region31: #{simple_nn_forward.1} parent=1 // pred_check_branch
      %349 = sbr.rel (0) target = $region33
    $region32: #{simple_nn_forward.1} parent=1 // pred_region
      %s351 = ssub.s32 16, 16
      %352 = vsyncadd [#allocation4], %s351
      %s354 = sshll.u32 [#allocation3], 4
      %s355 = int_to_ptr.vmem [resolvable:$true] %s354
      %357 = dma.vmem_to_hbm [thread:$0]  %s355, 16, %s7, [#allocation4]
    $region33: #{simple_nn_forward.1} parent=1 // pred_fallthru
      _
    // Predicated region
    $region34: #{simple_nn_forward.1} parent=1 // pred_check
      _
    $region35: #{simple_nn_forward.1} parent=1 // pred_check_branch
      %359 = sbr.rel (0) target = $region37
    $region36: #{simple_nn_forward.1} parent=1 // pred_region
      %360 = dma.done [#allocation4], 16
    $region37: #{simple_nn_forward.1} parent=1 // pred_fallthru
      _
    %361 = vsyncpa [#allocation4], 1

</llo_original>
